<compile_context>
chip_gen: v6e
topology: v6e:2x2x1
jax: 0.10.0
libtpu: 0.0.40
codegen_flags: <defaults>
</compile_context>

<pallas_src>
import functools

import jax
import jax.numpy as jnp
from jax import lax
from jax.experimental import pallas as pl
from jax.experimental.pallas import tpu as pltpu


def _round_up(x, m):
    return (x + m - 1) // m * m


def _focal_loss_kernel(logits_ref, targets_ref, out_ref, acc_ref, *,
                       alpha, gamma, n_valid, block_n, class_axis, needs_mask):
    """One batch tile per grid step; running sum kept in a (1,1) scratch accumulator."""
    step = pl.program_id(0)

    @pl.when(step == 0)
    def _init():
        acc_ref[...] = jnp.zeros_like(acc_ref)

    x = logits_ref[...].astype(jnp.float32)   # (C, TN) if class_axis == 0 else (TN, C)
    tgt = targets_ref[...]                    # (1, TN)                  or (TN, 1)

    # One-hot of the target class without a gather.
    cls = lax.broadcasted_iota(jnp.int32, x.shape, class_axis)
    one_hot = (cls == tgt).astype(jnp.float32)

    # Numerically stable per-sample cross entropy: CE = logsumexp(x) - x[target].
    m = jnp.max(x, axis=class_axis, keepdims=True)
    lse = m + jnp.log(jnp.sum(jnp.exp(x - m), axis=class_axis, keepdims=True))
    tgt_logit = jnp.sum(one_hot * x, axis=class_axis, keepdims=True)
    ce = jnp.maximum(lse - tgt_logit, 0.0)     # clamp tiny negative rounding error

    # Focal factor (1 - pt) with pt = exp(-CE). The relative precision loss of
    # 1 - exp(-ce) near ce == 0 only affects terms ~ce**(gamma+1), which are
    # negligible in the mean (exp is kept for guaranteed Mosaic lowering).
    focal = 1.0 - jnp.exp(-ce)

    g = float(gamma)
    if g == 0.0:
        w = jnp.ones_like(focal)
    elif g == float(int(g)) and 1 <= int(g) <= 8:
        # Integer gamma (default gamma=2): VPU multiply chain, no EUP log/exp pow.
        w = focal
        for _ in range(int(g) - 1):
            w = w * focal
    else:
        w = focal ** jnp.float32(g)

    # NOTE: scalar alpha, matching the reference PyTorch module (not per-class alpha).
    f = jnp.float32(alpha) * w * ce            # (1, TN) or (TN, 1)

    if needs_mask:
        batch_axis = 1 - class_axis
        gidx = lax.broadcasted_iota(jnp.int32, f.shape, batch_axis) + step * block_n
        f = jnp.where(gidx < n_valid, f, 0.0)

    acc_ref[...] += jnp.sum(f, keepdims=True)  # (1,1) running sum, stays in scratch

    @pl.when(step == pl.num_programs(0) - 1)
    def _finalize():
        out_ref[...] = acc_ref[...] / jnp.float32(n_valid)   # reduction='mean'


def focal_loss(logits, targets, alpha=1.0, gamma=2.0, block_n=None,
               target_block_bytes=2 * 1024 * 1024):
    """logits: (N, C) float32/bfloat16, targets: (N,) int class indices. Returns scalar."""
    n, c = logits.shape
    targets = targets.astype(jnp.int32)
    itemsize = jnp.dtype(logits.dtype).itemsize

    lane_dense = c < 128
    if lane_dense:
        # Small class count: put batch on the 128-lane axis (class on sublanes)
        # so VPU/EUP work and the class reductions are lane-dense.
        gran = 128
        if block_n is None:
            block_n = max(gran, (target_block_bytes // (c * itemsize)) // gran * gran)
        block_n = min(_round_up(block_n, gran), _round_up(n, gran))
        n_pad = _round_up(n, block_n)
        x = jnp.pad(jnp.transpose(logits), ((0, 0), (0, n_pad - n)))   # (C, Np)
        t = jnp.pad(targets, (0, n_pad - n)).reshape(1, n_pad)         # (1, Np)
        in_specs = [pl.BlockSpec((c, block_n), lambda i: (0, i)),
                    pl.BlockSpec((1, block_n), lambda i: (0, i))]
        class_axis = 0
    else:
        # Large class count: classes already fill the lanes; tile over batch rows.
        gran = {4: 8, 2: 16, 1: 32}.get(itemsize, 8)
        if block_n is None:
            block_n = max(gran, (target_block_bytes // (c * itemsize)) // gran * gran)
        block_n = min(_round_up(block_n, gran), _round_up(n, gran))
        n_pad = _round_up(n, block_n)
        x = jnp.pad(logits, ((0, n_pad - n), (0, 0)))                  # (Np, C)
        t = jnp.pad(targets, (0, n_pad - n)).reshape(n_pad, 1)         # (Np, 1)
        in_specs = [pl.BlockSpec((block_n, c), lambda i: (i, 0)),
                    pl.BlockSpec((block_n, 1), lambda i: (i, 0))]
        class_axis = 1

    grid = (n_pad // block_n,)
    kernel = functools.partial(
        _focal_loss_kernel, alpha=float(alpha), gamma=float(gamma),
        n_valid=n, block_n=block_n, class_axis=class_axis,
        needs_mask=(n_pad != n))

    out = pl.pallas_call(
        kernel,
        out_shape=jax.ShapeDtypeStruct((1, 1), jnp.float32),
        grid_spec=pltpu.PrefetchScalarGridSpec(
            num_scalar_prefetch=0,
            grid=grid,
            in_specs=in_specs,
            out_specs=pl.BlockSpec((1, 1), lambda i: (0, 0)),
            scratch_shapes=[pltpu.VMEM((1, 1), jnp.float32)],
        ),
        compiler_params=pltpu.CompilerParams(
            # Serial running-sum accumulation across batch tiles.
            dimension_semantics=("arbitrary",),
            vmem_limit_bytes=32 * 1024 * 1024,
        ),
    )(x, t)
    return out[0, 0]


def focal_loss_ref(logits, targets, alpha=1.0, gamma=2.0):
    # Pure-JAX reference mirroring the PyTorch module.
    logits = logits.astype(jnp.float32)
    lse = jax.scipy.special.logsumexp(logits, axis=-1)
    ce = lse - jnp.take_along_axis(logits, targets[:, None].astype(jnp.int32), axis=-1)[:, 0]
    pt = jnp.exp(-ce)
    return jnp.mean(alpha * (1.0 - pt) ** gamma * ce)


if __name__ == "__main__":
    key = jax.random.PRNGKey(0)

    # Case 1: small class count (lane-dense transposed path), single tile, ragged mask.
    k1, k2 = jax.random.split(key)
    N, C = 8, 32
    logits = jax.random.normal(k1, (N, C), dtype=jnp.float32)
    targets = jax.random.randint(k2, (N,), 0, C, dtype=jnp.int32)
    out = jax.block_until_ready(focal_loss(logits, targets, alpha=1.0, gamma=2.0))
    ref = focal_loss_ref(logits, targets, alpha=1.0, gamma=2.0)
    assert jnp.allclose(out, ref, atol=1e-5, rtol=1e-5), (out, ref)

    # Case 2: multiple batch tiles + ragged tail (accumulator across grid steps).
    k3, k4 = jax.random.split(k1)
    N2, C2 = 300, 32
    logits2 = jax.random.normal(k3, (N2, C2), dtype=jnp.float32)
    targets2 = jax.random.randint(k4, (N2,), 0, C2, dtype=jnp.int32)
    out2 = jax.block_until_ready(
        focal_loss(logits2, targets2, alpha=0.25, gamma=2.0, block_n=128))
    ref2 = focal_loss_ref(logits2, targets2, alpha=0.25, gamma=2.0)
    assert jnp.allclose(out2, ref2, atol=1e-5, rtol=1e-5), (out2, ref2)

    # Case 3: class count >= 128 (row-major path) with bfloat16 logits.
    k5, k6 = jax.random.split(k3)
    N3, C3 = 16, 128
    logits3 = jax.random.normal(k5, (N3, C3), dtype=jnp.bfloat16)
    targets3 = jax.random.randint(k6, (N3,), 0, C3, dtype=jnp.int32)
    out3 = jax.block_until_ready(focal_loss(logits3, targets3, alpha=1.0, gamma=2.0))
    ref3 = focal_loss_ref(logits3, targets3, alpha=1.0, gamma=2.0)
    assert jnp.allclose(out3, ref3, atol=1e-4, rtol=1e-4), (out3, ref3)

    print("KERNEL_OK")
</pallas_src>

<mosaic_0001>
module attributes {stable_mosaic.version = 11 : i64} {
  func.func @_focal_loss_kernel(%arg0: i32, %arg1: memref<32x128xf32, #tpu.memory_space<vmem>>, %arg2: memref<1x128xi32, #tpu.memory_space<vmem>>, %arg3: memref<1x1xf32, #tpu.memory_space<vmem>>, %arg4: memref<1x1xf32, #tpu.memory_space<vmem>>) attributes {dimension_semantics = [#tpu.dimension_semantics<arbitrary>], iteration_bounds = array<i64: 1>, scalar_prefetch = 0 : i64, scratch_operands = 1 : i64, tpu.core_type = #tpu.core_type<tc>, window_params = [{transform_indices = @transform_0, window_bounds = array<i64: 32, 128>}, {transform_indices = @transform_1, window_bounds = array<i64: 1, 128>}, {pipeline_mode = #tpu.pipeline_mode<synchronous>, transform_indices = @transform_2, window_bounds = array<i64: 1, 1>}]} {
    %c0_i32 = arith.constant 0 : i32
    %0 = arith.cmpi eq, %arg0, %c0_i32 : i32
    %1 = arith.extui %0 : i1 to i32
    %c0_i32_0 = arith.constant 0 : i32
    %2 = arith.cmpi ne, %1, %c0_i32_0 : i32
    scf.if %2 {
      %cst_18 = arith.constant 0.000000e+00 : f32
      %53 = vector.broadcast %cst_18 : f32 to vector<1x1xf32>
      %c0_19 = arith.constant 0 : index
      %c0_20 = arith.constant 0 : index
      %54 = vector.load %arg4[%c0_19, %c0_20] : memref<1x1xf32, #tpu.memory_space<vmem>>, vector<1x1xf32>
      tpu.vector_store %arg4[%c0_19, %c0_20], %53 {strides = array<i32>} : memref<1x1xf32, #tpu.memory_space<vmem>>, vector<1x1xf32>,
    } else {
    }
    %c0 = arith.constant 0 : index
    %c0_1 = arith.constant 0 : index
    %3 = vector.load %arg1[%c0, %c0_1] : memref<32x128xf32, #tpu.memory_space<vmem>>, vector<32x128xf32>
    %c0_2 = arith.constant 0 : index
    %c0_3 = arith.constant 0 : index
    %4 = vector.load %arg2[%c0_2, %c0_3] : memref<1x128xi32, #tpu.memory_space<vmem>>, vector<1x128xi32>
    %5 = tpu.iota {dimensions = array<i32: 0>} : vector<32x128xi32>
    %6 = vector.broadcast %4 : vector<1x128xi32> to vector<32x128xi32>
    %7 = arith.cmpi eq, %5, %6 : vector<32x128xi32>
    %8 = arith.extui %7 : vector<32x128xi1> to vector<32x128xi32>
    %9 = arith.sitofp %8 : vector<32x128xi32> to vector<32x128xf32>
    %cst = arith.constant dense<0xFF800000> : vector<128xf32>
    %10 = vector.multi_reduction <maximumf>, %3, %cst [0] : vector<32x128xf32> to vector<128xf32>
    %11 = vector.shape_cast %10 : vector<128xf32> to vector<1x128xf32>
    %12 = vector.broadcast %11 : vector<1x128xf32> to vector<32x128xf32>
    %13 = arith.subf %3, %12 : vector<32x128xf32>
    %14 = math.exp %13 : vector<32x128xf32>
    %cst_4 = arith.constant dense<0.000000e+00> : vector<128xf32>
    %15 = vector.multi_reduction <add>, %14, %cst_4 [0] : vector<32x128xf32> to vector<128xf32>
    %16 = vector.shape_cast %15 : vector<128xf32> to vector<1x128xf32>
    %17 = math.log %16 : vector<1x128xf32>
    %18 = arith.addf %11, %17 : vector<1x128xf32>
    %19 = arith.mulf %9, %3 : vector<32x128xf32>
    %cst_5 = arith.constant dense<0.000000e+00> : vector<128xf32>
    %20 = vector.multi_reduction <add>, %19, %cst_5 [0] : vector<32x128xf32> to vector<128xf32>
    %21 = vector.shape_cast %20 : vector<128xf32> to vector<1x128xf32>
    %22 = arith.subf %18, %21 : vector<1x128xf32>
    %cst_6 = arith.constant 0.000000e+00 : f32
    %23 = vector.broadcast %cst_6 : f32 to vector<1x128xf32>
    %24 = arith.maximumf %22, %23 : vector<1x128xf32>
    %cst_7 = arith.constant 0.000000e+00 : f32
    %25 = vector.broadcast %cst_7 : f32 to vector<1x128xf32>
    %26 = arith.subf %25, %24 : vector<1x128xf32>
    %27 = math.exp %26 : vector<1x128xf32>
    %cst_8 = arith.constant 1.000000e+00 : f32
    %28 = vector.broadcast %cst_8 : f32 to vector<1x128xf32>
    %29 = arith.subf %28, %27 : vector<1x128xf32>
    %30 = arith.mulf %29, %29 : vector<1x128xf32>
    %cst_9 = arith.constant 1.000000e+00 : f32
    %31 = vector.broadcast %cst_9 : f32 to vector<1x128xf32>
    %32 = arith.mulf %31, %30 : vector<1x128xf32>
    %33 = arith.mulf %32, %24 : vector<1x128xf32>
    %34 = tpu.iota {dimensions = array<i32: 1>} : vector<1x128xi32>
    %c128_i32 = arith.constant 128 : i32
    %35 = arith.muli %arg0, %c128_i32 : i32
    %36 = vector.broadcast %35 : i32 to vector<1x128xi32>
    %37 = arith.addi %34, %36 : vector<1x128xi32>
    %c8_i32 = arith.constant 8 : i32
    %38 = vector.broadcast %c8_i32 : i32 to vector<1x128xi32>
    %39 = arith.cmpi slt, %37, %38 : vector<1x128xi32>
    %cst_10 = arith.constant 0.000000e+00 : f32
    %40 = vector.broadcast %cst_10 : f32 to vector<1x128xf32>
    %41 = arith.select %39, %33, %40 : vector<1x128xi1>, vector<1x128xf32>
    %c0_11 = arith.constant 0 : index
    %c0_12 = arith.constant 0 : index
    %42 = vector.load %arg4[%c0_11, %c0_12] : memref<1x1xf32, #tpu.memory_space<vmem>>, vector<1x1xf32>
    %43 = vector.shape_cast %41 : vector<1x128xf32> to vector<1x1x128xf32>
    %cst_13 = arith.constant dense<0.000000e+00> : vector<1xf32>
    %44 = vector.multi_reduction <add>, %43, %cst_13 [1, 2] : vector<1x1x128xf32> to vector<1xf32>
    %45 = vector.shape_cast %44 : vector<1xf32> to vector<1x1x1xf32>
    %46 = vector.extract %45[0, 0, 0] : f32 from vector<1x1x1xf32>
    %47 = vector.broadcast %46 : f32 to vector<1x1xf32>
    %48 = arith.addf %42, %47 : vector<1x1xf32>
    %c0_14 = arith.constant 0 : index
    %c0_15 = arith.constant 0 : index
    %49 = vector.load %arg4[%c0_14, %c0_15] : memref<1x1xf32, #tpu.memory_space<vmem>>, vector<1x1xf32>
    tpu.vector_store %arg4[%c0_14, %c0_15], %48 {strides = array<i32>} : memref<1x1xf32, #tpu.memory_space<vmem>>, vector<1x1xf32>,
    %c0_i32_16 = arith.constant 0 : i32
    %50 = arith.cmpi eq, %arg0, %c0_i32_16 : i32
    %51 = arith.extui %50 : i1 to i32
    %c0_i32_17 = arith.constant 0 : i32
    %52 = arith.cmpi ne, %51, %c0_i32_17 : i32
    scf.if %52 {
      %c0_18 = arith.constant 0 : index
      %c0_19 = arith.constant 0 : index
      %53 = vector.load %arg4[%c0_18, %c0_19] : memref<1x1xf32, #tpu.memory_space<vmem>>, vector<1x1xf32>
      %cst_20 = arith.constant 8.000000e+00 : f32
      %54 = vector.broadcast %cst_20 : f32 to vector<1x1xf32>
      %55 = arith.divf %53, %54 : vector<1x1xf32>
      %c0_21 = arith.constant 0 : index
      %c0_22 = arith.constant 0 : index
      %56 = vector.load %arg3[%c0_21, %c0_22] : memref<1x1xf32, #tpu.memory_space<vmem>>, vector<1x1xf32>
      tpu.vector_store %arg3[%c0_21, %c0_22], %55 {strides = array<i32>} : memref<1x1xf32, #tpu.memory_space<vmem>>, vector<1x1xf32>,
    } else {
    }
    return
  }
  func.func @transform_0(%arg0: i32) -> (i32, i32) {
    %c0_i32 = arith.constant 0 : i32
    %c0_i32_0 = arith.constant 0 : i32
    return %c0_i32, %arg0 : i32, i32
  }
  func.func @transform_1(%arg0: i32) -> (i32, i32) {
    %c0_i32 = arith.constant 0 : i32
    %c0_i32_0 = arith.constant 0 : i32
    return %c0_i32, %arg0 : i32, i32
  }
  func.func @transform_2(%arg0: i32) -> (i32, i32) {
    %c0_i32 = arith.constant 0 : i32
    %c0_i32_0 = arith.constant 0 : i32
    %c0_i32_1 = arith.constant 0 : i32
    return %c0_i32, %c0_i32_0 : i32, i32
  }
}

</mosaic_0001>

<llo_original>
// kernel: tpu_custom_call.1
$region0: #{tpu_custom_call.1}
  #allocation0 [shape = 'u32[]', space=smem, size = 0x4, offset = 0x4, fixed_abs, tag = 'smem constant byte address 0x4 - core index']
  #allocation1 [shape = 'u32[144,128]{1,0:T(1,128)}', space=vmem, size = 0x12000, scoped, tag = 'internal scratch']
  #allocation2 [shape = 'f32[1,1]{1,0:T(1,128)}', space=vmem, size = 0x200, scoped, tag = 'scratch operand']
  %s0 = inlined_call_operand.hbm [shape: f32[32,128], index: 0, kind: input, shape index: {}]
  %s1 = inlined_call_operand.vmem [shape: s32[1,128], index: 1, kind: input, shape index: {}]
  %s2 = inlined_call_operand.hbm [shape: f32[1,1], index: 2, kind: output, shape index: {}]
  %s3 = sld [smem:[#allocation0]]
  $region30: #{tpu_custom_call.1} parent=0
    _
  %s5 = ssub.s32 1, %s3
  %s6 = scalar_select 0, %s5, %s3
  $region1: #{tpu_custom_call.1} parent=0
    #allocation3 [shape = 'u8[16384]{0}', space=vmem, size = 0x4000, scoped, tag = 'input window, operand 0, single buffered']
    #allocation4 [shape = 's32[1]{0}', space=sflag, size = 0x4, scoped, tag = 'scoped memory for tpu_custom_call.1']
    #allocation5 [shape = 's32[1]{0}', space=sflag, size = 0x4, scoped, tag = 'scoped memory for tpu_custom_call.1']
    #allocation6 [shape = 'u8[512]{0}', space=vmem, size = 0x400, scoped, tag = 'output window, operand 0, single buffered']
    %7 = vsyncpa [#allocation4], 0
    %8 = vsyncpa [#allocation5], 0
    // Predicated region
    $region2: #{tpu_custom_call.1} parent=1 // pred_check
      _
    $region3: #{tpu_custom_call.1} parent=1 // pred_check_branch
      %10 = sbr.rel (0) target = $region5
    $region4: #{tpu_custom_call.1} parent=1 // pred_region
      %s12 = ssub.s32 512, 512
      %13 = vsyncadd [#allocation4], %s12
      %s14 = sshll.u32 [#allocation3], 4
      %s15 = int_to_ptr.vmem [resolvable:$true] %s14
      %20 = dma.hbm_to_vmem [thread:$0]  %s0, 512, %s15, [#allocation4], 128, 128, 8
    $region5: #{tpu_custom_call.1} parent=1 // pred_fallthru
      _
    // Predicated region
    $region6: #{tpu_custom_call.1} parent=1 // pred_check
      _
    $region7: #{tpu_custom_call.1} parent=1 // pred_check_branch
      %22 = sbr.rel (0) target = $region9
    $region8: #{tpu_custom_call.1} parent=1 // pred_region
      _
    $region9: #{tpu_custom_call.1} parent=1 // pred_fallthru
      _
    // Predicated region
    $region10: #{tpu_custom_call.1} parent=1 // pred_check
      _
    $region11: #{tpu_custom_call.1} parent=1 // pred_check_branch
      %24 = sbr.rel (0) target = $region13
    $region12: #{tpu_custom_call.1} parent=1 // pred_region
      %25 = dma.done [#allocation4], 512
    $region13: #{tpu_custom_call.1} parent=1 // pred_fallthru
      _
    %p26 = scmp.eq.s32.totalorder 0, 0
    // Predicated region
    $region14: #{tpu_custom_call.1} parent=1 // pred_check
      %p27 = pneg %p26
    $region15: #{tpu_custom_call.1} parent=1 // pred_check_branch
      %29 = sbr.rel (%p27) target = $region17
    $region16: #{tpu_custom_call.1} parent=1 // pred_region
      %vm30 = vcmask 0
      %31 = vst.msk [vmem:[#allocation2] sm:$0x1] %vm30, 0.0
    $region17: #{tpu_custom_call.1} parent=1 // pred_fallthru
      _
    %v32 = vld [vmem:[#allocation3] sm:$0xff]
    %v33 = vld [vmem:[#allocation3 + $0x8] sm:$0xff]
    %v34 = vld [vmem:[#allocation3 + $0x10] sm:$0xff]
    %v35 = vld [vmem:[#allocation3 + $0x18] sm:$0xff]
    %v36 = vld [vmem:[%s1] sm:$0x1]
    %v37 = vlaneseq
    %v38 = vshrl.u32 %v37, 7
    %v39 = vadd.s32 %v38, 8
    %v40 = vadd.s32 %v38, 16
    %v41 = vadd.s32 %v38, 24
    %v42 = vlaneseq
    %v43 = vshrl.u32 %v42, 7
    %v44 = vsub.s32 0, %v43
    %v45 = vrot.slane %v36, %v44
    %vm46 = vcmp.eq.s32.totalorder %v38, %v45
    %vm47 = vcmp.eq.s32.totalorder %v39, %v45
    %vm48 = vcmp.eq.s32.totalorder %v40, %v45
    %vm49 = vcmp.eq.s32.totalorder %v41, %v45
    %v50 = vsel %vm46, 1, 0
    %v51 = vsel %vm47, 1, 0
    %v52 = vsel %vm48, 1, 0
    %v53 = vsel %vm49, 1, 0
    %v54 = vcvt.s32.f32 %v50
    %v55 = vcvt.s32.f32 %v51
    %v56 = vcvt.s32.f32 %v52
    %v57 = vcvt.s32.f32 %v53
    %v58 = vmax.f32 %v32, %v33
    %v59 = vmax.f32 %v34, %v35
    %v60 = vmax.f32 %v58, %v59
    %v61 = vrot.slane %v60, 4
    %v62 = vmax.f32 %v60, %v61
    %v63 = vrot.slane %v62, 2
    %v64 = vmax.f32 %v62, %v63
    %v65 = vrot.slane %v64, 1
    %v66 = vmax.f32 %v64, %v65
    %v67 = vsub.f32 %v32, %v66
    %v68 = vsub.f32 %v33, %v66
    %v69 = vsub.f32 %v34, %v66
    %v70 = vsub.f32 %v35, %v66
    %v71 = vmul.f32 %v67, 1.442695
    %v72 = vpow.pop %v71
    %v73 = vmul.f32 %v68, 1.442695
    %v74 = vpow.pop %v73
    %v75 = vmul.f32 %v69, 1.442695
    %v76 = vpow.pop %v75
    %v77 = vmul.f32 %v70, 1.442695
    %v78 = vpow.pop %v77
    %v79 = vadd.f32 %v72, %v74
    %v80 = vadd.f32 %v79, %v76
    %v81 = vadd.f32 %v80, %v78
    %v82 = vrot.slane %v81, 4
    %v83 = vadd.f32 %v81, %v82
    %v84 = vrot.slane %v83, 2
    %v85 = vadd.f32 %v83, %v84
    %v86 = vrot.slane %v85, 1
    %v87 = vadd.f32 %v85, %v86
    %v88 = vlog2.pop %v87
    %v89 = vmul.f32 %v88, 0.6931472
    %v90 = vadd.f32 %v66, %v89
    %v91 = vmul.f32 %v54, %v32
    %v92 = vmul.f32 %v55, %v33
    %v93 = vmul.f32 %v56, %v34
    %v94 = vmul.f32 %v57, %v35
    %v95 = vadd.f32 %v91, %v92
    %v96 = vadd.f32 %v95, %v93
    %v97 = vadd.f32 %v96, %v94
    %v98 = vrot.slane %v97, 4
    %v99 = vadd.f32 %v97, %v98
    %v100 = vrot.slane %v99, 2
    %v101 = vadd.f32 %v99, %v100
    %v102 = vrot.slane %v101, 1
    %v103 = vadd.f32 %v101, %v102
    %v104 = vsub.f32 %v90, %v103
    %v105 = vmax.f32 %v104, 0.0
    %v106 = vsub.f32 0.0, %v105
    %v107 = vmul.f32 %v106, 1.442695
    %v108 = vpow.pop %v107
    %v109 = vsub.f32 1.0, %v108
    %v110 = vmul.f32 %v109, %v109
    %v111 = vmul.f32 %v110, %v105
    %v112 = vlaneseq
    %v113 = vand.u32 %v112, 127
    %s114 = smul.u32 0, 128
    %v115 = vstv %s114
    %v116 = vadd.s32 %v113, %v115
    %vm117 = vcmp.lt.s32.totalorder %v116, 8
    %v118 = vsel %vm117, %v111, 0.0
    %v119 = vld [vmem:[#allocation2] sm:$0x1]
    %vm120 = vcmask 1040384
    %v121 = vsel %vm120, %v118, 0.0
    %122 = vadd.xlane.f32.xlu0 %v121
    %v123 = vpop.xlane.xlu0 %122
    %v124 = vrot.slane %v123, 4
    %v125 = vadd.f32 %v123, %v124
    %v126 = vrot.slane %v125, 2
    %v127 = vadd.f32 %v125, %v126
    %v128 = vrot.slane %v127, 1
    %v129 = vadd.f32 %v127, %v128
    %s130 = vtos %v129
    %v131 = vstv %s130
    %v132 = vadd.f32 %v119, %v131
    %vm133 = vcmask 0
    %134 = vst.msk [vmem:[#allocation2] sm:$0x1] %vm133, %v132
    // Predicated region
    $region18: #{tpu_custom_call.1} parent=1 // pred_check
      %p135 = pneg %p26
    $region19: #{tpu_custom_call.1} parent=1 // pred_check_branch
      %137 = sbr.rel (%p135) target = $region21
    $region20: #{tpu_custom_call.1} parent=1 // pred_region
      %v138 = vld [vmem:[#allocation2] sm:$0x1]
      %v139 = vrcp.pop 8.0
      %v140 = vmul.f32 %v138, %v139
      %141 = vst.msk [vmem:[#allocation6] sm:$0x1] %vm133, %v140
    $region21: #{tpu_custom_call.1} parent=1 // pred_fallthru
      _
    // Predicated region
    $region22: #{tpu_custom_call.1} parent=1 // pred_check
      _
    $region23: #{tpu_custom_call.1} parent=1 // pred_check_branch
      %143 = sbr.rel (0) target = $region25
    $region24: #{tpu_custom_call.1} parent=1 // pred_region
      %s145 = ssub.s32 16, 16
      %146 = vsyncadd [#allocation5], %s145
      %s148 = sshll.u32 [#allocation6], 4
      %s149 = int_to_ptr.vmem [resolvable:$true] %s148
      %151 = dma.vmem_to_hbm [thread:$0]  %s149, 16, %s2, [#allocation5]
    $region25: #{tpu_custom_call.1} parent=1 // pred_fallthru
      _
    // Predicated region
    $region26: #{tpu_custom_call.1} parent=1 // pred_check
      _
    $region27: #{tpu_custom_call.1} parent=1 // pred_check_branch
      %153 = sbr.rel (0) target = $region29
    $region28: #{tpu_custom_call.1} parent=1 // pred_region
      %154 = dma.done [#allocation5], 16
    $region29: #{tpu_custom_call.1} parent=1 // pred_fallthru
      _
    %155 = vsyncpa [#allocation4], 1
    %156 = vsyncpa [#allocation5], 1

</llo_original>
